<compile_context>
chip_gen: v5e
topology: v5e:2x2
jax: 0.10.0
libtpu: 0.0.40
codegen_flags: <defaults>
</compile_context>

<pallas_src>
import jax
import jax.numpy as jnp
from jax import lax
from jax.experimental import pallas as pl
from jax.experimental.pallas import tpu as pltpu


def attention_kernel(hid_ref, enc_ref, wattn_ref, battn_ref,
                     wout_ctx_ref, wout_hid_ref,
                     h_tilde_ref, attn_w_ref, attn_e_ref):
    hid = hid_ref[...]          # (Bt, T, Dt)
    enc = enc_ref[...]          # (Bt, S, De)
    Bt, T, Dt = hid.shape
    _, S, De = enc.shape

    hid_flat = hid.reshape(Bt * T, Dt)

    # p = hidden @ W_attn  (W_attn kept in torch layout (Dt, De) -> no transpose)
    # Flattened so the batch folds into the MXU M dimension.
    p = jnp.dot(hid_flat, wattn_ref[...],
                preferred_element_type=jnp.float32)            # (Bt*T, De)
    p3 = p.reshape(Bt, T, De)

    # Bias contribution of the refactor: (hid . b_attn) broadcast over S.
    # Done on the VPU/XLU (free slots) instead of a lane-sparse (Dt,1) matmul.
    hb = jnp.sum(hid * battn_ref[...], axis=-1, keepdims=True)  # (Bt, T, 1)

    # attn_energies = p @ enc^T  (batched, contract De; MXU handles B-transposed
    # contraction natively, no energies.T materialization)
    ae = lax.dot_general(p3, enc, (((2,), (2,)), ((0,), (0,))),
                         preferred_element_type=jnp.float32)    # (Bt, T, S)
    ae = ae + hb
    attn_e_ref[...] = ae

    # softmax over src_len (matches F.softmax(ae.view(-1,S), dim=1))
    m = jnp.max(ae, axis=-1, keepdims=True)
    e = jnp.exp(ae - m)
    w = e / jnp.sum(e, axis=-1, keepdims=True)
    attn_w_ref[...] = w

    # weighted context = w @ enc  (batched, contract S)
    wc = lax.dot_general(w, enc, (((2,), (1,)), ((0,), (0,))),
                         preferred_element_type=jnp.float32)    # (Bt, T, De)

    # h_tilde = tanh(cat([wc, hid]) @ W_out^T) with the concat eliminated:
    #   = tanh(wc @ W_out_ctx^T + hid @ W_out_hid^T), weights pre-transposed.
    ht = (jnp.dot(wc.reshape(Bt * T, De), wout_ctx_ref[...],
                  preferred_element_type=jnp.float32)
          + jnp.dot(hid_flat, wout_hid_ref[...],
                    preferred_element_type=jnp.float32))        # (Bt*T, Dt)
    h_tilde_ref[...] = jnp.tanh(ht).reshape(Bt, T, Dt)


def _pick_block_b(B, max_bt=8):
    """Largest divisor of B (<= max_bt) that keeps the grid >= 2 steps if possible."""
    divisors = [d for d in range(1, min(B, max_bt) + 1) if B % d == 0]
    for d in sorted(divisors, reverse=True):
        if B // d >= 2:
            return d
    return max(divisors)


def attention_general(hidden, encoder_outputs, w_attn, b_attn, w_out, block_b=None):
    """hidden: (B,T,Dt), encoder_outputs: (B,S,De); returns (h_tilde, attn_w, attn_e).

    w_attn : (Dt, De)        -- nn.Linear(enc_dim, trg_dim).weight
    b_attn : (Dt,)           -- nn.Linear(enc_dim, trg_dim).bias
    w_out  : (Dt, De + Dt)   -- nn.Linear(enc_dim+trg_dim, trg_dim, bias=False).weight
    """
    B, T, Dt = hidden.shape
    _, S, De = encoder_outputs.shape

    if block_b is None:
        block_b = _pick_block_b(B)
    assert B % block_b == 0, "batch must be divisible by block_b"
    grid_b = B // block_b

    # Wrapper-side layout plumbing (free vs per-step in-kernel XLU work):
    b_attn_row = b_attn.reshape(1, Dt)          # row for broadcast dot with hidden
    wout_ctx_t = w_out[:, :De].T                # (De, Dt)
    wout_hid_t = w_out[:, De:].T                # (Dt, Dt)

    out_shapes = (
        jax.ShapeDtypeStruct((B, T, Dt), jnp.float32),   # h_tilde
        jax.ShapeDtypeStruct((B, T, S), jnp.float32),    # attn_weights
        jax.ShapeDtypeStruct((B, T, S), jnp.float32),    # attn_energies
    )

    grid_spec = pltpu.PrefetchScalarGridSpec(
        num_scalar_prefetch=0,
        grid=(grid_b,),
        in_specs=[
            pl.BlockSpec((block_b, T, Dt), lambda b: (b, 0, 0)),   # hidden
            pl.BlockSpec((block_b, S, De), lambda b: (b, 0, 0)),   # encoder_outputs
            pl.BlockSpec((Dt, De), lambda b: (0, 0)),              # W_attn (torch layout)
            pl.BlockSpec((1, Dt), lambda b: (0, 0)),               # b_attn row
            pl.BlockSpec((De, Dt), lambda b: (0, 0)),              # W_out_ctx^T
            pl.BlockSpec((Dt, Dt), lambda b: (0, 0)),              # W_out_hid^T
        ],
        out_specs=[
            pl.BlockSpec((block_b, T, Dt), lambda b: (b, 0, 0)),
            pl.BlockSpec((block_b, T, S), lambda b: (b, 0, 0)),
            pl.BlockSpec((block_b, T, S), lambda b: (b, 0, 0)),
        ],
    )

    return pl.pallas_call(
        attention_kernel,
        out_shape=out_shapes,
        grid_spec=grid_spec,
        compiler_params=pltpu.CompilerParams(
            dimension_semantics=("parallel",)),
    )(hidden, encoder_outputs, w_attn, b_attn_row, wout_ctx_t, wout_hid_t)


def attention_ref(hidden, encoder_outputs, w_attn, b_attn, w_out):
    """Pure-JAX reference mirroring the PyTorch forward (general, no mask)."""
    energies = jnp.einsum("bse,te->bst", encoder_outputs, w_attn) + b_attn
    ae = jnp.einsum("btd,bsd->bts", hidden, energies)
    w = jax.nn.softmax(ae, axis=-1)
    wc = jnp.einsum("bts,bse->bte", w, encoder_outputs)
    cat = jnp.concatenate([wc, hidden], axis=-1)
    h_tilde = jnp.tanh(jnp.einsum("btc,dc->btd", cat, w_out))
    return h_tilde, w, ae


if __name__ == "__main__":
    B, T, S = 8, 8, 16
    enc_dim, trg_dim = 32, 32

    key = jax.random.PRNGKey(0)
    k1, k2, k3, k4, k5 = jax.random.split(key, 5)

    hidden = jax.random.normal(k1, (B, T, trg_dim), dtype=jnp.float32)
    encoder_outputs = jax.random.normal(k2, (B, S, enc_dim), dtype=jnp.float32)

    # nn.Linear(enc_dim, trg_dim): weight (trg_dim, enc_dim), bias (trg_dim,)
    w_attn = (jax.random.normal(k3, (trg_dim, enc_dim), dtype=jnp.float32)
              * (1.0 / jnp.sqrt(enc_dim)))
    b_attn = jax.random.normal(k4, (trg_dim,), dtype=jnp.float32) * 0.1
    # nn.Linear(enc_dim + trg_dim, trg_dim, bias=False): weight (trg_dim, enc_dim+trg_dim)
    w_out = (jax.random.normal(k5, (trg_dim, enc_dim + trg_dim), dtype=jnp.float32)
             * (1.0 / jnp.sqrt(enc_dim + trg_dim)))

    h_tilde, attn_w, attn_e = attention_general(
        hidden, encoder_outputs, w_attn, b_attn, w_out)
    jax.block_until_ready((h_tilde, attn_w, attn_e))

    h_ref, w_ref, e_ref = attention_ref(
        hidden, encoder_outputs, w_attn, b_attn, w_out)

    assert jnp.allclose(h_tilde, h_ref, atol=1e-5, rtol=1e-5)
    assert jnp.allclose(attn_w, w_ref, atol=1e-5, rtol=1e-5)
    assert jnp.allclose(attn_e, e_ref, atol=1e-4, rtol=1e-5)

    # TODO(synk): 'concat' / 'dot' attention variants and the encoder_mask branch
    # (masked_softmax with clamp) are not implemented; default 'general' + no-mask
    # path is reproduced exactly. attn_energies output kept in f32 to preserve the
    # module's return signature (it doubles (B,T,S) HBM writeback).
    print("KERNEL_OK")
</pallas_src>

<mosaic_0001>
module attributes {stable_mosaic.version = 11 : i64} {
  func.func @attention_kernel(%arg0: i32, %arg1: memref<4x8x32xf32, #tpu.memory_space<vmem>>, %arg2: memref<4x16x32xf32, #tpu.memory_space<vmem>>, %arg3: memref<32x32xf32, #tpu.memory_space<vmem>>, %arg4: memref<1x32xf32, #tpu.memory_space<vmem>>, %arg5: memref<32x32xf32, #tpu.memory_space<vmem>>, %arg6: memref<32x32xf32, #tpu.memory_space<vmem>>, %arg7: memref<4x8x32xf32, #tpu.memory_space<vmem>>, %arg8: memref<4x8x16xf32, #tpu.memory_space<vmem>>, %arg9: memref<4x8x16xf32, #tpu.memory_space<vmem>>) attributes {dimension_semantics = [#tpu.dimension_semantics<parallel>], iteration_bounds = array<i64: 2>, scalar_prefetch = 0 : i64, scratch_operands = 0 : i64, tpu.core_type = #tpu.core_type<tc>, window_params = [{transform_indices = @transform_0, window_bounds = array<i64: 4, 8, 32>}, {transform_indices = @transform_1, window_bounds = array<i64: 4, 16, 32>}, {pipeline_mode = #tpu.pipeline_mode<synchronous>, transform_indices = @transform_2, window_bounds = array<i64: 32, 32>}, {pipeline_mode = #tpu.pipeline_mode<synchronous>, transform_indices = @transform_3, window_bounds = array<i64: 1, 32>}, {pipeline_mode = #tpu.pipeline_mode<synchronous>, transform_indices = @transform_4, window_bounds = array<i64: 32, 32>}, {pipeline_mode = #tpu.pipeline_mode<synchronous>, transform_indices = @transform_5, window_bounds = array<i64: 32, 32>}, {transform_indices = @transform_6, window_bounds = array<i64: 4, 8, 32>}, {transform_indices = @transform_7, window_bounds = array<i64: 4, 8, 16>}, {transform_indices = @transform_8, window_bounds = array<i64: 4, 8, 16>}]} {
    %c0 = arith.constant 0 : index
    %c0_0 = arith.constant 0 : index
    %c0_1 = arith.constant 0 : index
    %0 = vector.load %arg1[%c0, %c0_0, %c0_1] : memref<4x8x32xf32, #tpu.memory_space<vmem>>, vector<4x8x32xf32>
    %c0_2 = arith.constant 0 : index
    %c0_3 = arith.constant 0 : index
    %c0_4 = arith.constant 0 : index
    %1 = vector.load %arg2[%c0_2, %c0_3, %c0_4] : memref<4x16x32xf32, #tpu.memory_space<vmem>>, vector<4x16x32xf32>
    %2 = vector.shape_cast %0 : vector<4x8x32xf32> to vector<32x32xf32>
    %c0_5 = arith.constant 0 : index
    %c0_6 = arith.constant 0 : index
    %3 = vector.load %arg3[%c0_5, %c0_6] : memref<32x32xf32, #tpu.memory_space<vmem>>, vector<32x32xf32>
    %cst = arith.constant dense<0.000000e+00> : vector<32x32xf32>
    %4 = tpu.matmul %2, %3, %cst {dimension_numbers = #tpu.dot_dimension_numbers<[1], [0], [0], [1], [0, 0, 1, 1], [], []>} : vector<32x32xf32>, vector<32x32xf32>, vector<32x32xf32> -> vector<32x32xf32>
    %5 = vector.shape_cast %4 : vector<32x32xf32> to vector<4x8x32xf32>
    %c0_7 = arith.constant 0 : index
    %c0_8 = arith.constant 0 : index
    %6 = vector.load %arg4[%c0_7, %c0_8] : memref<1x32xf32, #tpu.memory_space<vmem>>, vector<1x32xf32>
    %7 = vector.shape_cast %6 : vector<1x32xf32> to vector<1x1x32xf32>
    %8 = vector.broadcast %7 : vector<1x1x32xf32> to vector<4x8x32xf32>
    %9 = arith.mulf %0, %8 : vector<4x8x32xf32>
    %cst_9 = arith.constant dense<0.000000e+00> : vector<4x8xf32>
    %10 = vector.multi_reduction <add>, %9, %cst_9 [2] : vector<4x8x32xf32> to vector<4x8xf32>
    %11 = vector.shape_cast %10 : vector<4x8xf32> to vector<4x8x1xf32>
    %cst_10 = arith.constant dense<0.000000e+00> : vector<4x8x16xf32>
    %12 = tpu.matmul %5, %1, %cst_10 {dimension_numbers = #tpu.dot_dimension_numbers<[2], [2], [1], [1], [0, 0, 0, 1, 1, 1], [0], [0]>} : vector<4x8x32xf32>, vector<4x16x32xf32>, vector<4x8x16xf32> -> vector<4x8x16xf32>
    %13 = vector.broadcast %11 : vector<4x8x1xf32> to vector<4x8x16xf32>
    %14 = arith.addf %12, %13 : vector<4x8x16xf32>
    %c0_11 = arith.constant 0 : index
    %c0_12 = arith.constant 0 : index
    %c0_13 = arith.constant 0 : index
    %15 = vector.load %arg9[%c0_11, %c0_12, %c0_13] : memref<4x8x16xf32, #tpu.memory_space<vmem>>, vector<4x8x16xf32>
    tpu.vector_store %arg9[%c0_11, %c0_12, %c0_13], %14 {strides = array<i32>} : memref<4x8x16xf32, #tpu.memory_space<vmem>>, vector<4x8x16xf32>,
    %cst_14 = arith.constant dense<0xFF800000> : vector<4x8xf32>
    %16 = vector.multi_reduction <maximumf>, %14, %cst_14 [2] : vector<4x8x16xf32> to vector<4x8xf32>
    %17 = vector.shape_cast %16 : vector<4x8xf32> to vector<4x8x1xf32>
    %18 = vector.broadcast %17 : vector<4x8x1xf32> to vector<4x8x16xf32>
    %19 = arith.subf %14, %18 : vector<4x8x16xf32>
    %20 = math.exp %19 : vector<4x8x16xf32>
    %cst_15 = arith.constant dense<0.000000e+00> : vector<4x8xf32>
    %21 = vector.multi_reduction <add>, %20, %cst_15 [2] : vector<4x8x16xf32> to vector<4x8xf32>
    %22 = vector.shape_cast %21 : vector<4x8xf32> to vector<4x8x1xf32>
    %23 = vector.broadcast %22 : vector<4x8x1xf32> to vector<4x8x16xf32>
    %24 = arith.divf %20, %23 : vector<4x8x16xf32>
    %c0_16 = arith.constant 0 : index
    %c0_17 = arith.constant 0 : index
    %c0_18 = arith.constant 0 : index
    %25 = vector.load %arg8[%c0_16, %c0_17, %c0_18] : memref<4x8x16xf32, #tpu.memory_space<vmem>>, vector<4x8x16xf32>
    tpu.vector_store %arg8[%c0_16, %c0_17, %c0_18], %24 {strides = array<i32>} : memref<4x8x16xf32, #tpu.memory_space<vmem>>, vector<4x8x16xf32>,
    %cst_19 = arith.constant dense<0.000000e+00> : vector<4x8x32xf32>
    %26 = tpu.matmul %24, %1, %cst_19 {dimension_numbers = #tpu.dot_dimension_numbers<[2], [1], [1], [2], [0, 0, 0, 1, 1, 2], [0], [0]>} : vector<4x8x16xf32>, vector<4x16x32xf32>, vector<4x8x32xf32> -> vector<4x8x32xf32>
    %27 = vector.shape_cast %26 : vector<4x8x32xf32> to vector<32x32xf32>
    %c0_20 = arith.constant 0 : index
    %c0_21 = arith.constant 0 : index
    %28 = vector.load %arg5[%c0_20, %c0_21] : memref<32x32xf32, #tpu.memory_space<vmem>>, vector<32x32xf32>
    %cst_22 = arith.constant dense<0.000000e+00> : vector<32x32xf32>
    %29 = tpu.matmul %27, %28, %cst_22 {dimension_numbers = #tpu.dot_dimension_numbers<[1], [0], [0], [1], [0, 0, 1, 1], [], []>} : vector<32x32xf32>, vector<32x32xf32>, vector<32x32xf32> -> vector<32x32xf32>
    %c0_23 = arith.constant 0 : index
    %c0_24 = arith.constant 0 : index
    %30 = vector.load %arg6[%c0_23, %c0_24] : memref<32x32xf32, #tpu.memory_space<vmem>>, vector<32x32xf32>
    %cst_25 = arith.constant dense<0.000000e+00> : vector<32x32xf32>
    %31 = tpu.matmul %2, %30, %cst_25 {dimension_numbers = #tpu.dot_dimension_numbers<[1], [0], [0], [1], [0, 0, 1, 1], [], []>} : vector<32x32xf32>, vector<32x32xf32>, vector<32x32xf32> -> vector<32x32xf32>
    %32 = arith.addf %29, %31 : vector<32x32xf32>
    %33 = math.tanh %32 : vector<32x32xf32>
    %34 = vector.shape_cast %33 : vector<32x32xf32> to vector<4x8x32xf32>
    %c0_26 = arith.constant 0 : index
    %c0_27 = arith.constant 0 : index
    %c0_28 = arith.constant 0 : index
    %35 = vector.load %arg7[%c0_26, %c0_27, %c0_28] : memref<4x8x32xf32, #tpu.memory_space<vmem>>, vector<4x8x32xf32>
    tpu.vector_store %arg7[%c0_26, %c0_27, %c0_28], %34 {strides = array<i32>} : memref<4x8x32xf32, #tpu.memory_space<vmem>>, vector<4x8x32xf32>,
    return
  }
  func.func @transform_0(%arg0: i32) -> (i32, i32, i32) {
    %c0_i32 = arith.constant 0 : i32
    %c0_i32_0 = arith.constant 0 : i32
    %c0_i32_1 = arith.constant 0 : i32
    return %arg0, %c0_i32, %c0_i32_0 : i32, i32, i32
  }
  func.func @transform_1(%arg0: i32) -> (i32, i32, i32) {
    %c0_i32 = arith.constant 0 : i32
    %c0_i32_0 = arith.constant 0 : i32
    %c0_i32_1 = arith.constant 0 : i32
    return %arg0, %c0_i32, %c0_i32_0 : i32, i32, i32
  }
  func.func @transform_2(%arg0: i32) -> (i32, i32) {
    %c0_i32 = arith.constant 0 : i32
    %c0_i32_0 = arith.constant 0 : i32
    %c0_i32_1 = arith.constant 0 : i32
    return %c0_i32, %c0_i32_0 : i32, i32
  }
  func.func @transform_3(%arg0: i32) -> (i32, i32) {
    %c0_i32 = arith.constant 0 : i32
    %c0_i32_0 = arith.constant 0 : i32
    %c0_i32_1 = arith.constant 0 : i32
    return %c0_i32, %c0_i32_0 : i32, i32
  }
  func.func @transform_4(%arg0: i32) -> (i32, i32) {
    %c0_i32 = arith.constant 0 : i32
    %c0_i32_0 = arith.constant 0 : i32
    %c0_i32_1 = arith.constant 0 : i32
    return %c0_i32, %c0_i32_0 : i32, i32
  }
  func.func @transform_5(%arg0: i32) -> (i32, i32) {
    %c0_i32 = arith.constant 0 : i32
    %c0_i32_0 = arith.constant 0 : i32
    %c0_i32_1 = arith.constant 0 : i32
    return %c0_i32, %c0_i32_0 : i32, i32
  }
  func.func @transform_6(%arg0: i32) -> (i32, i32, i32) {
    %c0_i32 = arith.constant 0 : i32
    %c0_i32_0 = arith.constant 0 : i32
    %c0_i32_1 = arith.constant 0 : i32
    return %arg0, %c0_i32, %c0_i32_0 : i32, i32, i32
  }
  func.func @transform_7(%arg0: i32) -> (i32, i32, i32) {
    %c0_i32 = arith.constant 0 : i32
    %c0_i32_0 = arith.constant 0 : i32
    %c0_i32_1 = arith.constant 0 : i32
    return %arg0, %c0_i32, %c0_i32_0 : i32, i32, i32
  }
  func.func @transform_8(%arg0: i32) -> (i32, i32, i32) {
    %c0_i32 = arith.constant 0 : i32
    %c0_i32_0 = arith.constant 0 : i32
    %c0_i32_1 = arith.constant 0 : i32
    return %arg0, %c0_i32, %c0_i32_0 : i32, i32, i32
  }
}

</mosaic_0001>

<llo_original>
// kernel: tpu_custom_call.1
$region0: #{tpu_custom_call.1}
  #allocation0 [shape = 'u32[]', space=smem, size = 0x4, offset = 0x4, fixed_abs, tag = 'smem constant byte address 0x4 - core index']
  #allocation1 [shape = 'u32[72,128]{1,0:T(1,128)}', space=vmem, size = 0x9000, scoped, tag = 'internal scratch']
  %s0 = inlined_call_operand.hbm [shape: f32[8,8,32], index: 0, kind: input, shape index: {}]
  %s1 = inlined_call_operand.hbm [shape: f32[8,16,32], index: 1, kind: input, shape index: {}]
  %s2 = inlined_call_operand.hbm [shape: f32[32,32], index: 2, kind: input, shape index: {}]
  %s3 = inlined_call_operand.vmem [shape: f32[1,32], index: 3, kind: input, shape index: {}]
  %s4 = inlined_call_operand.hbm [shape: f32[32,32], index: 4, kind: input, shape index: {}]
  %s5 = inlined_call_operand.hbm [shape: f32[32,32], index: 5, kind: input, shape index: {}]
  %s6 = inlined_call_operand.hbm [shape: f32[8,8,32], index: 6, kind: output, shape index: {0}]
  %s7 = inlined_call_operand.hbm [shape: f32[8,8,16], index: 7, kind: output, shape index: {1}]
  %s8 = inlined_call_operand.hbm [shape: f32[8,8,16], index: 8, kind: output, shape index: {2}]
  %9 = xla_tuple %s6, %s7, %s8
  %s10 = sld [smem:[#allocation0]]
  $region93: #{tpu_custom_call.1} parent=0
    _
  %s12 = ssub.s32 1, %s10
  %s13 = scalar_select 0, %s12, %s10
  $region1: #{tpu_custom_call.1} parent=0
    #allocation2 [shape = 'u8[32768]{0}', space=vmem, size = 0x8000, scoped, tag = 'input window, operand 0']
    #allocation3 [shape = 's32[2]{0}', space=sflag, size = 0x8, scoped, tag = 'scoped memory for tpu_custom_call.1']
    #allocation4 [shape = 's32[2]{0}', space=sflag, size = 0x8, scoped, tag = 'scoped memory for tpu_custom_call.1']
    #allocation5 [shape = 'u8[65536]{0}', space=vmem, size = 0x10000, scoped, tag = 'input window, operand 1']
    #allocation6 [shape = 's32[2]{0}', space=sflag, size = 0x8, scoped, tag = 'scoped memory for tpu_custom_call.1']
    #allocation7 [shape = 'u8[16384]{0}', space=vmem, size = 0x4000, scoped, tag = 'input window, operand 2, single buffered']
    #allocation8 [shape = 'u8[16384]{0}', space=vmem, size = 0x4000, scoped, tag = 'input window, operand 4, single buffered']
    #allocation9 [shape = 's32[1]{0}', space=sflag, size = 0x4, scoped, tag = 'scoped memory for tpu_custom_call.1']
    #allocation10 [shape = 'u8[16384]{0}', space=vmem, size = 0x4000, scoped, tag = 'input window, operand 5, single buffered']
    #allocation11 [shape = 'u8[32768]{0}', space=vmem, size = 0x8000, scoped, tag = 'output window, operand 0']
    #allocation12 [shape = 'u8[32768]{0}', space=vmem, size = 0x8000, scoped, tag = 'output window, operand 1']
    #allocation13 [shape = 's32[2]{0}', space=sflag, size = 0x8, scoped, tag = 'scoped memory for tpu_custom_call.1']
    #allocation14 [shape = 'u8[32768]{0}', space=vmem, size = 0x8000, scoped, tag = 'output window, operand 2']
    %14 = vsyncpa [#allocation3], 0
    %s15 = scalar_lea.sflag [#allocation3], 1
    %16 = vsyncpa %s15, 0
    %17 = vsyncpa [#allocation6], 0
    %s18 = scalar_lea.sflag [#allocation6], 1
    %19 = vsyncpa %s18, 0
    %20 = vsyncpa [#allocation9], 0
    %21 = vsyncpa [#allocation4], 0
    %s22 = scalar_lea.sflag [#allocation4], 1
    %23 = vsyncpa %s22, 0
    %24 = vsyncpa [#allocation13], 0
    %s25 = scalar_lea.sflag [#allocation13], 1
    %26 = vsyncpa %s25, 0
    loop: start=0, step=1, limit=4
    $region2: #{tpu_custom_call.1} parent=1 // loop_pre_header
      _
    $region3: #{tpu_custom_call.1} parent=1 // loop_header
      %s28 = sphi 0, %s32
      %p29 = scmp.ge.s32.totalorder %s28, 4
      %s38 = sphi 0, %s40
      %s41 = sphi 0, %s38
      %s42 = sphi 0, %s41
      %s58 = sphi 0, %s42
      %s64 = sphi 0, %s66
      %s67 = sphi 0, %s64
      %s68 = sphi 0, %s67
      %s84 = sphi 0, %s68
      %s88 = sphi 0, %s88
      %s90 = sphi 0, %s88
      %s91 = sphi 0, %s90
      %s105 = sphi 0, %s91
      %s109 = sphi 0, %s109
      %s111 = sphi 0, %s109
      %s112 = sphi 0, %s111
      %s126 = sphi 0, %s112
      %s130 = sphi 0, %s130
      %s132 = sphi 0, %s130
      %s133 = sphi 0, %s132
      %s147 = sphi 0, %s133
      %s151 = sphi 0, %s151
      %s153 = sphi 0, %s151
      %s154 = sphi 0, %s153
      %s168 = sphi 0, %s154
      %s174 = sphi 0, %s176
      %s177 = sphi 0, %s174
      %s178 = sphi 0, %s177
      %s194 = sphi 0, %s178
      %s200 = sphi 0, %s202
      %s203 = sphi 0, %s200
      %s204 = sphi 0, %s203
      %s220 = sphi 0, %s204
      %s226 = sphi 0, %s228
      %s229 = sphi 0, %s226
      %s230 = sphi 0, %s229
      %s246 = sphi 0, %s230
    $region4: #{tpu_custom_call.1} parent=1 // loop_header_branch
      %31 = sbr.rel (%p29) target = $region8
    $region5: #{tpu_custom_call.1} parent=1 // loop_body
      %s33 = ssub.s32 %s28, 1
      %s34 = ssub.s32 %s28, 2
      %s35 = sadd.s32 %s28, 1
      %s36 = ssub.s32 %s28, %s35
      %p37 = scmp.eq.s32.totalorder %s36, 0
      %s39 = sadd.s32 %s38, 1
      %s40 = scalar_select %p37, %s38, %s39
      %p43 = pneg %p37
      %p44 = scmp.eq.s32.totalorder %s28, 1
      %p45 = por %p43, %p44
      %p46 = scmp.ne.s32.totalorder %s38, %s41
      %p47 = scmp.eq.s32.totalorder %s28, 0
      %p48 = por %p46, %p47
      %p49 = scmp.ne.s32.totalorder %s38, %s41
      %p50 = scmp.eq.s32.totalorder %s33, 1
      %p51 = por %p49, %p50
      %p52 = scmp.ne.s32.totalorder %s41, %s42
      %p53 = scmp.eq.s32.totalorder %s33, 0
      %p54 = por %p52, %p53
      %p55 = scmp.ne.s32.totalorder %s41, %s42
      %p56 = scmp.eq.s32.totalorder %s34, 1
      %p57 = por %p55, %p56
      %p59 = scmp.ne.s32.totalorder %s42, %s58
      %p60 = scmp.eq.s32.totalorder %s34, 0
      %p61 = por %p59, %p60
      %s62 = ssub.s32 %s28, %s35
      %p63 = scmp.eq.s32.totalorder %s62, 0
      %s65 = sadd.s32 %s64, 1
      %s66 = scalar_select %p63, %s64, %s65
      %p69 = pneg %p63
      %p70 = scmp.eq.s32.totalorder %s28, 1
      %p71 = por %p69, %p70
      %p72 = scmp.ne.s32.totalorder %s64, %s67
      %p73 = scmp.eq.s32.totalorder %s28, 0
      %p74 = por %p72, %p73
      %p75 = scmp.ne.s32.totalorder %s64, %s67
      %p76 = scmp.eq.s32.totalorder %s33, 1
      %p77 = por %p75, %p76
      %p78 = scmp.ne.s32.totalorder %s67, %s68
      %p79 = scmp.eq.s32.totalorder %s33, 0
      %p80 = por %p78, %p79
      %p81 = scmp.ne.s32.totalorder %s67, %s68
      %p82 = scmp.eq.s32.totalorder %s34, 1
      %p83 = por %p81, %p82
      %p85 = scmp.ne.s32.totalorder %s68, %s84
      %p86 = scmp.eq.s32.totalorder %s34, 0
      %p87 = por %p85, %p86
      %s89 = sadd.s32 %s88, 1
      %p92 = scmp.eq.s32.totalorder %s28, 1
      %p93 = scmp.ne.s32.totalorder %s88, %s90
      %p94 = scmp.eq.s32.totalorder %s28, 0
      %p95 = por %p93, %p94
      %p96 = scmp.ne.s32.totalorder %s88, %s90
      %p97 = scmp.eq.s32.totalorder %s33, 1
      %p98 = por %p96, %p97
      %p99 = scmp.ne.s32.totalorder %s90, %s91
      %p100 = scmp.eq.s32.totalorder %s33, 0
      %p101 = por %p99, %p100
      %p102 = scmp.ne.s32.totalorder %s90, %s91
      %p103 = scmp.eq.s32.totalorder %s34, 1
      %p104 = por %p102, %p103
      %p106 = scmp.ne.s32.totalorder %s91, %s105
      %p107 = scmp.eq.s32.totalorder %s34, 0
      %p108 = por %p106, %p107
      %s110 = sadd.s32 %s109, 1
      %p113 = scmp.eq.s32.totalorder %s28, 1
      %p114 = scmp.ne.s32.totalorder %s109, %s111
      %p115 = scmp.eq.s32.totalorder %s28, 0
      %p116 = por %p114, %p115
      %p117 = scmp.ne.s32.totalorder %s109, %s111
      %p118 = scmp.eq.s32.totalorder %s33, 1
      %p119 = por %p117, %p118
      %p120 = scmp.ne.s32.totalorder %s111, %s112
      %p121 = scmp.eq.s32.totalorder %s33, 0
      %p122 = por %p120, %p121
      %p123 = scmp.ne.s32.totalorder %s111, %s112
      %p124 = scmp.eq.s32.totalorder %s34, 1
      %p125 = por %p123, %p124
      %p127 = scmp.ne.s32.totalorder %s112, %s126
      %p128 = scmp.eq.s32.totalorder %s34, 0
      %p129 = por %p127, %p128
      %s131 = sadd.s32 %s130, 1
      %p134 = scmp.eq.s32.totalorder %s28, 1
      %p135 = scmp.ne.s32.totalorder %s130, %s132
      %p136 = scmp.eq.s32.totalorder %s28, 0
      %p137 = por %p135, %p136
      %p138 = scmp.ne.s32.totalorder %s130, %s132
      %p139 = scmp.eq.s32.totalorder %s33, 1
      %p140 = por %p138, %p139
      %p141 = scmp.ne.s32.totalorder %s132, %s133
      %p142 = scmp.eq.s32.totalorder %s33, 0
      %p143 = por %p141, %p142
      %p144 = scmp.ne.s32.totalorder %s132, %s133
      %p145 = scmp.eq.s32.totalorder %s34, 1
      %p146 = por %p144, %p145
      %p148 = scmp.ne.s32.totalorder %s133, %s147
      %p149 = scmp.eq.s32.totalorder %s34, 0
      %p150 = por %p148, %p149
      %s152 = sadd.s32 %s151, 1
      %p155 = scmp.eq.s32.totalorder %s28, 1
      %p156 = scmp.ne.s32.totalorder %s151, %s153
      %p157 = scmp.eq.s32.totalorder %s28, 0
      %p158 = por %p156, %p157
      %p159 = scmp.ne.s32.totalorder %s151, %s153
      %p160 = scmp.eq.s32.totalorder %s33, 1
      %p161 = por %p159, %p160
      %p162 = scmp.ne.s32.totalorder %s153, %s154
      %p163 = scmp.eq.s32.totalorder %s33, 0
      %p164 = por %p162, %p163
      %p165 = scmp.ne.s32.totalorder %s153, %s154
      %p166 = scmp.eq.s32.totalorder %s34, 1
      %p167 = por %p165, %p166
      %p169 = scmp.ne.s32.totalorder %s154, %s168
      %p170 = scmp.eq.s32.totalorder %s34, 0
      %p171 = por %p169, %p170
      %s172 = ssub.s32 %s28, %s35
      %p173 = scmp.eq.s32.totalorder %s172, 0
      %s175 = sadd.s32 %s174, 1
      %s176 = scalar_select %p173, %s174, %s175
      %p179 = pneg %p173
      %p180 = scmp.eq.s32.totalorder %s28, 1
      %p181 = por %p179, %p180
      %p182 = scmp.ne.s32.totalorder %s174, %s177
      %p183 = scmp.eq.s32.totalorder %s28, 0
      %p184 = por %p182, %p183
      %p185 = scmp.ne.s32.totalorder %s174, %s177
      %p186 = scmp.eq.s32.totalorder %s33, 1
      %p187 = por %p185, %p186
      %p188 = scmp.ne.s32.totalorder %s177, %s178
      %p189 = scmp.eq.s32.totalorder %s33, 0
      %p190 = por %p188, %p189
      %p191 = scmp.ne.s32.totalorder %s177, %s178
      %p192 = scmp.eq.s32.totalorder %s34, 1
      %p193 = por %p191, %p192
      %p195 = scmp.ne.s32.totalorder %s178, %s194
      %p196 = scmp.eq.s32.totalorder %s34, 0
      %p197 = por %p195, %p196
      %s198 = ssub.s32 %s28, %s35
      %p199 = scmp.eq.s32.totalorder %s198, 0
      %s201 = sadd.s32 %s200, 1
      %s202 = scalar_select %p199, %s200, %s201
      %p205 = pneg %p199
      %p206 = scmp.eq.s32.totalorder %s28, 1
      %p207 = por %p205, %p206
      %p208 = scmp.ne.s32.totalorder %s200, %s203
      %p209 = scmp.eq.s32.totalorder %s28, 0
      %p210 = por %p208, %p209
      %p211 = scmp.ne.s32.totalorder %s200, %s203
      %p212 = scmp.eq.s32.totalorder %s33, 1
      %p213 = por %p211, %p212
      %p214 = scmp.ne.s32.totalorder %s203, %s204
      %p215 = scmp.eq.s32.totalorder %s33, 0
      %p216 = por %p214, %p215
      %p217 = scmp.ne.s32.totalorder %s203, %s204
      %p218 = scmp.eq.s32.totalorder %s34, 1
      %p219 = por %p217, %p218
      %p221 = scmp.ne.s32.totalorder %s204, %s220
      %p222 = scmp.eq.s32.totalorder %s34, 0
      %p223 = por %p221, %p222
      %s224 = ssub.s32 %s28, %s35
      %p225 = scmp.eq.s32.totalorder %s224, 0
      %s227 = sadd.s32 %s226, 1
      %s228 = scalar_select %p225, %s226, %s227
      %p231 = pneg %p225
      %p232 = scmp.eq.s32.totalorder %s28, 1
      %p233 = por %p231, %p232
      %p234 = scmp.ne.s32.totalorder %s226, %s229
      %p235 = scmp.eq.s32.totalorder %s28, 0
      %p236 = por %p234, %p235
      %p237 = scmp.ne.s32.totalorder %s226, %s229
      %p238 = scmp.eq.s32.totalorder %s33, 1
      %p239 = por %p237, %p238
      %p240 = scmp.ne.s32.totalorder %s229, %s230
      %p241 = scmp.eq.s32.totalorder %s33, 0
      %p242 = por %p240, %p241
      %p243 = scmp.ne.s32.totalorder %s229, %s230
      %p244 = scmp.eq.s32.totalorder %s34, 1
      %p245 = por %p243, %p244
      %p247 = scmp.ne.s32.totalorder %s230, %s246
      %p248 = scmp.eq.s32.totalorder %s34, 0
      %p249 = por %p247, %p248
      %p250 = scmp.le.s32.totalorder 1, %s28
      %p251 = scmp.lt.s32.totalorder %s28, 3
      %p252 = pnand %p250, %p251
      %p253 = pneg %p252
      // Predicated region
      $region9: #{tpu_custom_call.1} parent=5 // pred_check
        _
      $region10: #{tpu_custom_call.1} parent=5 // pred_check_branch
        %255 = sbr.rel (%p252) target = $region12
      $region11: #{tpu_custom_call.1} parent=5 // pred_region
        %s256 = ssub.s32 %s28, 1
        // Predicated region
        $region13: #{tpu_custom_call.1} parent=11 // pred_check
          %p257 = pneg %p101
        $region14: #{tpu_custom_call.1} parent=11 // pred_check_branch
          %259 = sbr.rel (%p257) target = $region16
        $region15: #{tpu_custom_call.1} parent=11 // pred_region
          %261 = vsyncadd [#allocation6], 0
          %s262 = sshll.u32 %s2, 4
          %s263 = int_to_ptr.hbm [resolvable:$true] %s262
          %s264 = sshll.u32 [#allocation7], 4
          %s265 = int_to_ptr.vmem [resolvable:$true] %s264
          %270 = dma.hbm_to_vmem [thread:$0]  %s263, 512, %s265, [#allocation6], 128, 128, 8
        $region16: #{tpu_custom_call.1} parent=11 // pred_fallthru
          _
        // Predicated region
        $region17: #{tpu_custom_call.1} parent=11 // pred_check
          %p271 = pneg %p122
        $region18: #{tpu_custom_call.1} parent=11 // pred_check_branch
          %273 = sbr.rel (%p271) target = $region20
        $region19: #{tpu_custom_call.1} parent=11 // pred_region
          _
        $region20: #{tpu_custom_call.1} parent=11 // pred_fallthru
          _
        // Predicated region
        $region21: #{tpu_custom_call.1} parent=11 // pred_check
          %p274 = pneg %p143
        $region22: #{tpu_custom_call.1} parent=11 // pred_check_branch
          %276 = sbr.rel (%p274) target = $region24
        $region23: #{tpu_custom_call.1} parent=11 // pred_region
          %278 = vsyncadd [#allocation9], 0
          %s279 = sshll.u32 %s4, 4
          %s280 = int_to_ptr.hbm [resolvable:$true] %s279
          %s281 = sshll.u32 [#allocation8], 4
          %s282 = int_to_ptr.vmem [resolvable:$true] %s281
          %287 = dma.hbm_to_vmem [thread:$0]  %s280, 512, %s282, [#allocation9], 128, 128, 8
        $region24: #{tpu_custom_call.1} parent=11 // pred_fallthru
          _
        // Predicated region
        $region25: #{tpu_custom_call.1} parent=11 // pred_check
          %p288 = pneg %p164
        $region26: #{tpu_custom_call.1} parent=11 // pred_check_branch
          %290 = sbr.rel (%p288) target = $region28
        $region27: #{tpu_custom_call.1} parent=11 // pred_region
          %292 = vsyncadd [#allocation9], 0
          %s293 = sshll.u32 %s5, 4
          %s294 = int_to_ptr.hbm [resolvable:$true] %s293
          %s295 = sshll.u32 [#allocation10], 4
          %s296 = int_to_ptr.vmem [resolvable:$true] %s295
          %301 = dma.hbm_to_vmem [thread:$0]  %s294, 512, %s296, [#allocation9], 128, 128, 8
        $region28: #{tpu_custom_call.1} parent=11 // pred_fallthru
          _
      $region12: #{tpu_custom_call.1} parent=5 // pred_fallthru
        _
      %p302 = scmp.lt.s32.totalorder %s28, 2
      // Predicated region
      $region29: #{tpu_custom_call.1} parent=5 // pred_check
        %p303 = pneg %p302
      $region30: #{tpu_custom_call.1} parent=5 // pred_check_branch
        %305 = sbr.rel (%p303) target = $region32
      $region31: #{tpu_custom_call.1} parent=5 // pred_region
        // Predicated region
        $region33: #{tpu_custom_call.1} parent=31 // pred_check
          %p306 = pneg %p48
        $region34: #{tpu_custom_call.1} parent=31 // pred_check_branch
          %308 = sbr.rel (%p306) target = $region36
        $region35: #{tpu_custom_call.1} parent=31 // pred_region
          %s309 = sand.u32 %s38, 1
          %s310 = scalar_lea.sflag [#allocation3], %s309
          %s311 = sand.u32 %s38, 1
          %s312 = smul.addr %s311, 32
          %s313 = scalar_lea.vmem [#allocation2], %s312
          %s314 = smul.u32 4, %s28
          %316 = vsyncadd %s310, 0
          %s317 = smul.addr %s314, 8
          %s318 = scalar_lea.hbm %s0, %s317
          %s319 = sshll.u32 %s318, 4
          %s320 = int_to_ptr.hbm [resolvable:$true] %s319
          %s321 = sshll.u32 %s313, 4
          %s322 = int_to_ptr.vmem [resolvable:$true] %s321
          %327 = dma.hbm_to_vmem [thread:$0]  %s320, 512, %s322, %s310, 128, 128, 8
        $region36: #{tpu_custom_call.1} parent=31 // pred_fallthru
          _
        // Predicated region
        $region37: #{tpu_custom_call.1} parent=31 // pred_check
          %p328 = pneg %p74
        $region38: #{tpu_custom_call.1} parent=31 // pred_check_branch
          %330 = sbr.rel (%p328) target = $region40
        $region39: #{tpu_custom_call.1} parent=31 // pred_region
          %s331 = sand.u32 %s28, 1
          %s332 = scalar_lea.sflag [#allocation6], %s331
          %s333 = sand.u32 %s64, 1
          %s334 = smul.addr %s333, 64
          %s335 = scalar_lea.vmem [#allocation5], %s334
          %s336 = smul.u32 4, %s28
          %338 = vsyncadd %s332, 0
          %s339 = smul.addr %s336, 2
          %s340 = smul.addr %s339, 8
          %s341 = scalar_lea.hbm %s1, %s340
          %s342 = sshll.u32 %s341, 4
          %s343 = int_to_ptr.hbm [resolvable:$true] %s342
          %s344 = sshll.u32 %s335, 4
          %s345 = int_to_ptr.vmem [resolvable:$true] %s344
          %350 = dma.hbm_to_vmem [thread:$0]  %s343, 1024, %s345, %s332, 128, 128, 8
        $region40: #{tpu_custom_call.1} parent=31 // pred_fallthru
          _
      $region32: #{tpu_custom_call.1} parent=5 // pred_fallthru
        _
      %p351 = scmp.le.s32.totalorder 1, %s28
      %p352 = scmp.lt.s32.totalorder %s28, 3
      %p353 = pnand %p351, %p352
      %p354 = pneg %p353
      // Predicated region
      $region41: #{tpu_custom_call.1} parent=5 // pred_check
        _
      $region42: #{tpu_custom_call.1} parent=5 // pred_check_branch
        %356 = sbr.rel (%p353) target = $region44
      $region43: #{tpu_custom_call.1} parent=5 // pred_region
        %s357 = ssub.s32 %s28, 1
        %s358 = sand.u32 %s41, 1
        %s359 = scalar_lea.sflag [#allocation3], %s358
        %s360 = sand.u32 %s41, 1
        %s361 = smul.addr %s360, 32
        %s362 = scalar_lea.vmem [#allocation2], %s361
        // Predicated region
        $region45: #{tpu_custom_call.1} parent=43 // pred_check
          %p363 = pneg %p54
        $region46: #{tpu_custom_call.1} parent=43 // pred_check_branch
          %365 = sbr.rel (%p363) target = $region48
        $region47: #{tpu_custom_call.1} parent=43 // pred_region
          %367 = dma.done %s359, 512
        $region48: #{tpu_custom_call.1} parent=43 // pred_fallthru
          _
        %s368 = sand.u32 %s33, 1
        %s369 = scalar_lea.sflag [#allocation6], %s368
        %s370 = sand.u32 %s67, 1
        %s371 = smul.addr %s370, 64
        %s372 = scalar_lea.vmem [#allocation5], %s371
        // Predicated region
        $region49: #{tpu_custom_call.1} parent=43 // pred_check
          %p373 = pneg %p80
        $region50: #{tpu_custom_call.1} parent=43 // pred_check_branch
          %375 = sbr.rel (%p373) target = $region52
        $region51: #{tpu_custom_call.1} parent=43 // pred_region
          %377 = dma.done %s369, 1024
        $region52: #{tpu_custom_call.1} parent=43 // pred_fallthru
          _
        // Predicated region
        $region53: #{tpu_custom_call.1} parent=43 // pred_check
          %p378 = pneg %p101
        $region54: #{tpu_custom_call.1} parent=43 // pred_check_branch
          %380 = sbr.rel (%p378) target = $region56
        $region55: #{tpu_custom_call.1} parent=43 // pred_region
          %382 = dma.done [#allocation6], 512
        $region56: #{tpu_custom_call.1} parent=43 // pred_fallthru
          _
        // Predicated region
        $region57: #{tpu_custom_call.1} parent=43 // pred_check
          %p383 = pneg %p143
        $region58: #{tpu_custom_call.1} parent=43 // pred_check_branch
          %385 = sbr.rel (%p383) target = $region60
        $region59: #{tpu_custom_call.1} parent=43 // pred_region
          %387 = dma.done [#allocation9], 512
        $region60: #{tpu_custom_call.1} parent=43 // pred_fallthru
          _
        // Predicated region
        $region61: #{tpu_custom_call.1} parent=43 // pred_check
          %p388 = pneg %p164
        $region62: #{tpu_custom_call.1} parent=43 // pred_check_branch
          %390 = sbr.rel (%p388) target = $region64
        $region63: #{tpu_custom_call.1} parent=43 // pred_region
          %392 = dma.done [#allocation9], 512
        $region64: #{tpu_custom_call.1} parent=43 // pred_fallthru
          _
        %s393 = sand.u32 %s41, 1
        %s394 = scalar_lea.sflag [#allocation3], %s393
        %s395 = sand.u32 %s41, 1
        %s396 = smul.addr %s395, 32
        %s397 = scalar_lea.vmem [#allocation2], %s396
        %p398 = pneg %p54
        %p399 = pneg %p51
        %s400 = sand.u32 %s33, 1
        %s401 = scalar_lea.sflag [#allocation6], %s400
        %s402 = sand.u32 %s67, 1
        %s403 = smul.addr %s402, 64
        %s404 = scalar_lea.vmem [#allocation5], %s403
        %p405 = pneg %p80
        %p406 = pneg %p77
        %p407 = pneg %p101
        %p408 = pneg %p98
        %p409 = pneg %p122
        %p410 = pneg %p119
        %p411 = pneg %p143
        %p412 = pneg %p140
        %p413 = pneg %p164
        %p414 = pneg %p161
        %p415 = pneg %p190
        %p416 = pneg %p187
        %s417 = sand.u32 %s177, 1
        %s418 = scalar_lea.sflag [#allocation4], %s417
        %s419 = sand.u32 %s177, 1
        %s420 = smul.addr %s419, 32
        %s421 = scalar_lea.vmem [#allocation11], %s420
        %p422 = pneg %p216
        %p423 = pneg %p213
        %s424 = sand.u32 %s33, 1
        %s425 = scalar_lea.sflag [#allocation13], %s424
        %s426 = sand.u32 %s203, 1
        %s427 = smul.addr %s426, 32
        %s428 = scalar_lea.vmem [#allocation12], %s427
        %p429 = pneg %p242
        %p430 = pneg %p239
        %s431 = sand.u32 %s33, 1
        %s432 = scalar_lea.sflag [#allocation13], %s431
        %s433 = sand.u32 %s229, 1
        %s434 = smul.addr %s433, 32
        %s435 = scalar_lea.vmem [#allocation14], %s434
        %s436 = smul.u32 4, %s33
        %s437 = smul.u32 4, %s33
        %s438 = smul.u32 4, %s33
        %s439 = smul.u32 4, %s33
        %s440 = smul.u32 4, %s33
        %v441 = vld [vmem:[%s362] sm:$0xff]
        %v442 = vld [vmem:[%s362 + $0x8] sm:$0xff]
        %v443 = vld [vmem:[%s362 + $0x10] sm:$0xff]
        %v444 = vld [vmem:[%s362 + $0x18] sm:$0xff]
        %v445 = vld [vmem:[%s372] sm:$0xff]
        %v446 = vld [vmem:[%s372 + $0x8] sm:$0xff]
        %v447 = vld [vmem:[%s372 + $0x10] sm:$0xff]
        %v448 = vld [vmem:[%s372 + $0x18] sm:$0xff]
        %v449 = vld [vmem:[%s372 + $0x20] sm:$0xff]
        %v450 = vld [vmem:[%s372 + $0x28] sm:$0xff]
        %v451 = vld [vmem:[%s372 + $0x30] sm:$0xff]
        %v452 = vld [vmem:[%s372 + $0x38] sm:$0xff]
        %v453 = vld [vmem:[#allocation7] sm:$0xff]
        %v454 = vld [vmem:[#allocation7 + $0x8] sm:$0xff]
        %v455 = vld [vmem:[#allocation7 + $0x10] sm:$0xff]
        %v456 = vld [vmem:[#allocation7 + $0x18] sm:$0xff]
        %vm457 = vcmask 261120
        %v459 = vsel %vm457, %v441, 0
        %v462 = vsel %vm457, %v442, 0
        %v465 = vsel %vm457, %v443, 0
        %v468 = vsel %vm457, %v444, 0
        %470 = vmatpush.msra.mxu0 0.0
        %471 = vmatpush.msra.mxu0 0.0
        %472 = vmatpush.msra.mxu0 0.0
        %473 = vmatpush.msra.mxu0 0.0
        %474 = vmatpush.msra.mxu0 0.0
        %475 = vmatpush.msra.mxu0 0.0
        %476 = vmatpush.msra.mxu0 0.0
        %477 = vmatpush.msra.mxu0 0.0
        %478 = vmatpush.msra.mxu0 0.0
        %479 = vmatpush.msra.mxu0 0.0
        %480 = vmatpush.msra.mxu0 0.0
        %481 = vmatpush.msra.mxu0 0.0
        %482 = vmatpush.msra.mxu0 %v456
        %483 = vmatpush.msra.mxu0 %v455
        %484 = vmatpush.msra.mxu0 %v454
        %485 = vmatpush.msra.mxu0 %v453
        %486 = vmatmul.f32.gmra.mxu0 %v459
        %v487 = vpop.f32.mrf.mxu0
        %v488 = vadd.f32 0.0, %v487
        %489 = vmatmul.f32.gmra.mxu0 %v462
        %v490 = vpop.f32.mrf.mxu0
        %v491 = vadd.f32 0.0, %v490
        %492 = vmatmul.f32.gmra.mxu0 %v465
        %v493 = vpop.f32.mrf.mxu0
        %v494 = vadd.f32 0.0, %v493
        %495 = vmatmul.f32.gmra.mxu0 %v468
        %v496 = vpop.f32.mrf.mxu0
        %v497 = vadd.f32 0.0, %v496
        %498 = vdwg.mxu0
        %v499 = vld [vmem:[%s3] sm:$0x1]
        %v501 = vperm.slane %v499, 0
        %v503 = vmul.f32 %v441, %v501
        %v504 = vmul.f32 %v442, %v501
        %v505 = vmul.f32 %v443, %v501
        %v506 = vmul.f32 %v444, %v501
        %v507 = vsel %vm457, %v503, 0.0
        %508 = vadd.xlane.f32.xlu0 %v507
        %v509 = vpop.xlane.xlu0 %508
        %v510 = vsel %vm457, %v504, 0.0
        %511 = vadd.xlane.f32.xlu0 %v510
        %v512 = vpop.xlane.xlu0 %511
        %v513 = vsel %vm457, %v505, 0.0
        %514 = vadd.xlane.f32.xlu0 %v513
        %v515 = vpop.xlane.xlu0 %514
        %v516 = vsel %vm457, %v506, 0.0
        %517 = vadd.xlane.f32.xlu0 %v516
        %v518 = vpop.xlane.xlu0 %517
        %v520 = vsel %vm457, %v488, 0
        %v523 = vsel %vm457, %v445, 0
        %v526 = vsel %vm457, %v446, 0
        %528 = vmatpush.xpose.msra.mxu0 0.0
        %529 = vmatpush.xpose.msra.mxu0 0.0
        %530 = vmatpush.xpose.msra.mxu0 0.0
        %531 = vmatpush.xpose.msra.mxu0 0.0
        %532 = vmatpush.xpose.msra.mxu0 0.0
        %533 = vmatpush.xpose.msra.mxu0 0.0
        %534 = vmatpush.xpose.msra.mxu0 0.0
        %535 = vmatpush.xpose.msra.mxu0 0.0
        %536 = vmatpush.xpose.msra.mxu0 0.0
        %537 = vmatpush.xpose.msra.mxu0 0.0
        %538 = vmatpush.xpose.msra.mxu0 0.0
        %539 = vmatpush.xpose.msra.mxu0 0.0
        %540 = vmatpush.xpose.msra.mxu0 0.0
        %541 = vmatpush.xpose.msra.mxu0 0.0
        %542 = vmatpush.xpose.msra.mxu0 %v526
        %543 = vmatpush.xpose.msra.mxu0 %v523
        %544 = vmatmul.f32.gmra.mxu0 %v520
        %v545 = vpop.f32.mrf.mxu0
        %v546 = vadd.f32 %v509, %v545
        %547 = vdwg.mxu0
        %v549 = vsel %vm457, %v491, 0
        %v552 = vsel %vm457, %v447, 0
        %v555 = vsel %vm457, %v448, 0
        %557 = vmatpush.xpose.msra.mxu0 0.0
        %558 = vmatpush.xpose.msra.mxu0 0.0
        %559 = vmatpush.xpose.msra.mxu0 0.0
        %560 = vmatpush.xpose.msra.mxu0 0.0
        %561 = vmatpush.xpose.msra.mxu0 0.0
        %562 = vmatpush.xpose.msra.mxu0 0.0
        %563 = vmatpush.xpose.msra.mxu0 0.0
        %564 = vmatpush.xpose.msra.mxu0 0.0
        %565 = vmatpush.xpose.msra.mxu0 0.0
        %566 = vmatpush.xpose.msra.mxu0 0.0
        %567 = vmatpush.xpose.msra.mxu0 0.0
        %568 = vmatpush.xpose.msra.mxu0 0.0
        %569 = vmatpush.xpose.msra.mxu0 0.0
        %570 = vmatpush.xpose.msra.mxu0 0.0
        %571 = vmatpush.xpose.msra.mxu0 %v555
        %572 = vmatpush.xpose.msra.mxu0 %v552
        %573 = vmatmul.f32.gmra.mxu0 %v549
        %v574 = vpop.f32.mrf.mxu0
        %v575 = vadd.f32 %v512, %v574
        %576 = vdwg.mxu0
        %v578 = vsel %vm457, %v494, 0
        %v581 = vsel %vm457, %v449, 0
        %v584 = vsel %vm457, %v450, 0
        %586 = vmatpush.xpose.msra.mxu0 0.0
        %587 = vmatpush.xpose.msra.mxu0 0.0
        %588 = vmatpush.xpose.msra.mxu0 0.0
        %589 = vmatpush.xpose.msra.mxu0 0.0
        %590 = vmatpush.xpose.msra.mxu0 0.0
        %591 = vmatpush.xpose.msra.mxu0 0.0
        %592 = vmatpush.xpose.msra.mxu0 0.0
        %593 = vmatpush.xpose.msra.mxu0 0.0
        %594 = vmatpush.xpose.msra.mxu0 0.0
        %595 = vmatpush.xpose.msra.mxu0 0.0
        %596 = vmatpush.xpose.msra.mxu0 0.0
        %597 = vmatpush.xpose.msra.mxu0 0.0
        %598 = vmatpush.xpose.msra.mxu0 0.0
        %599 = vmatpush.xpose.msra.mxu0 0.0
        %600 = vmatpush.xpose.msra.mxu0 %v584
        %601 = vmatpush.xpose.msra.mxu0 %v581
        %602 = vmatmul.f32.gmra.mxu0 %v578
        %v603 = vpop.f32.mrf.mxu0
        %v604 = vadd.f32 %v515, %v603
        %605 = vdwg.mxu0
        %v607 = vsel %vm457, %v497, 0
        %v610 = vsel %vm457, %v451, 0
        %v613 = vsel %vm457, %v452, 0
        %615 = vmatpush.xpose.msra.mxu0 0.0
        %616 = vmatpush.xpose.msra.mxu0 0.0
        %617 = vmatpush.xpose.msra.mxu0 0.0
        %618 = vmatpush.xpose.msra.mxu0 0.0
        %619 = vmatpush.xpose.msra.mxu0 0.0
        %620 = vmatpush.xpose.msra.mxu0 0.0
        %621 = vmatpush.xpose.msra.mxu0 0.0
        %622 = vmatpush.xpose.msra.mxu0 0.0
        %623 = vmatpush.xpose.msra.mxu0 0.0
        %624 = vmatpush.xpose.msra.mxu0 0.0
        %625 = vmatpush.xpose.msra.mxu0 0.0
        %626 = vmatpush.xpose.msra.mxu0 0.0
        %627 = vmatpush.xpose.msra.mxu0 0.0
        %628 = vmatpush.xpose.msra.mxu0 0.0
        %629 = vmatpush.xpose.msra.mxu0 %v613
        %630 = vmatpush.xpose.msra.mxu0 %v610
        %631 = vmatmul.f32.gmra.mxu0 %v607
        %v632 = vpop.f32.mrf.mxu0
        %v633 = vadd.f32 %v518, %v632
        %634 = vdwg.mxu0
        %vm635 = vcmask 130048
        %636 = vst.msk [vmem:[%s435] sm:$0xff] %vm635, %v546
        %637 = vst.msk [vmem:[%s435 + $0x8] sm:$0xff] %vm635, %v575
        %638 = vst.msk [vmem:[%s435 + $0x10] sm:$0xff] %vm635, %v604
        %639 = vst.msk [vmem:[%s435 + $0x18] sm:$0xff] %vm635, %v633
        %v640 = vsel %vm635, %v546, -inf
        %641 = vmax.xlane.f32.xlu0 %v640
        %v642 = vpop.xlane.xlu0 %641
        %v643 = vsel %vm635, %v575, -inf
        %644 = vmax.xlane.f32.xlu0 %v643
        %v645 = vpop.xlane.xlu0 %644
        %v646 = vsel %vm635, %v604, -inf
        %647 = vmax.xlane.f32.xlu0 %v646
        %v648 = vpop.xlane.xlu0 %647
        %v649 = vsel %vm635, %v633, -inf
        %650 = vmax.xlane.f32.xlu0 %v649
        %v651 = vpop.xlane.xlu0 %650
        %v652 = vsub.f32 %v546, %v642
        %v653 = vsub.f32 %v575, %v645
        %v654 = vsub.f32 %v604, %v648
        %v655 = vsub.f32 %v633, %v651
        %v656 = vmul.f32 %v652, 1.442695
        %v657 = vpow.pop %v656
        %v658 = vmul.f32 %v653, 1.442695
        %v659 = vpow.pop %v658
        %v660 = vmul.f32 %v654, 1.442695
        %v661 = vpow.pop %v660
        %v662 = vmul.f32 %v655, 1.442695
        %v663 = vpow.pop %v662
        %v664 = vsel %vm635, %v657, 0.0
        %665 = vadd.xlane.f32.xlu0 %v664
        %v666 = vpop.xlane.xlu0 %665
        %v667 = vsel %vm635, %v659, 0.0
        %668 = vadd.xlane.f32.xlu0 %v667
        %v669 = vpop.xlane.xlu0 %668
        %v670 = vsel %vm635, %v661, 0.0
        %671 = vadd.xlane.f32.xlu0 %v670
        %v672 = vpop.xlane.xlu0 %671
        %v673 = vsel %vm635, %v663, 0.0
        %674 = vadd.xlane.f32.xlu0 %v673
        %v675 = vpop.xlane.xlu0 %674
        %v676 = vrcp.pop %v666
        %v677 = vmul.f32 %v666, %v676
        %v678 = vsub.f32 1.0, %v677
        %v679 = vmul.f32 %v676, %v678
        %v680 = vadd.f32 %v676, %v679
        %vm681 = vweird.f32 %v666
        %vm682 = vweird.f32 %v676
        %vm683 = vmor %vm681, %vm682
        %v684 = vsel %vm683, %v676, %v680
        %v685 = vand.u32 2147483647, %v666
        %vm686 = vcmp.eq.f32.partialorder %v685, 8.507059e+37
        %v687 = vand.u32 %v666, 2147483648
        %v688 = vor.u32 1.1754944e-38, %v687
        %v689 = vsel %vm686, %v688, %v684
        %v690 = vmul.f32 %v657, %v689
        %v691 = vrcp.pop %v669
        %v692 = vmul.f32 %v669, %v691
        %v693 = vsub.f32 1.0, %v692
        %v694 = vmul.f32 %v691, %v693
        %v695 = vadd.f32 %v691, %v694
        %vm696 = vweird.f32 %v669
        %vm697 = vweird.f32 %v691
        %vm698 = vmor %vm696, %vm697
        %v699 = vsel %vm698, %v691, %v695
        %v700 = vand.u32 2147483647, %v669
        %vm701 = vcmp.eq.f32.partialorder %v700, 8.507059e+37
        %v702 = vand.u32 %v669, 2147483648
        %v703 = vor.u32 1.1754944e-38, %v702
        %v704 = vsel %vm701, %v703, %v699
        %v705 = vmul.f32 %v659, %v704
        %v706 = vrcp.pop %v672
        %v707 = vmul.f32 %v672, %v706
        %v708 = vsub.f32 1.0, %v707
        %v709 = vmul.f32 %v706, %v708
        %v710 = vadd.f32 %v706, %v709
        %vm711 = vweird.f32 %v672
        %vm712 = vweird.f32 %v706
        %vm713 = vmor %vm711, %vm712
        %v714 = vsel %vm713, %v706, %v710
        %v715 = vand.u32 2147483647, %v672
        %vm716 = vcmp.eq.f32.partialorder %v715, 8.507059e+37
        %v717 = vand.u32 %v672, 2147483648
        %v718 = vor.u32 1.1754944e-38, %v717
        %v719 = vsel %vm716, %v718, %v714
        %v720 = vmul.f32 %v661, %v719
        %v721 = vrcp.pop %v675
        %v722 = vmul.f32 %v675, %v721
        %v723 = vsub.f32 1.0, %v722
        %v724 = vmul.f32 %v721, %v723
        %v725 = vadd.f32 %v721, %v724
        %vm726 = vweird.f32 %v675
        %vm727 = vweird.f32 %v721
        %vm728 = vmor %vm726, %vm727
        %v729 = vsel %vm728, %v721, %v725
        %v730 = vand.u32 2147483647, %v675
        %vm731 = vcmp.eq.f32.partialorder %v730, 8.507059e+37
        %v732 = vand.u32 %v675, 2147483648
        %v733 = vor.u32 1.1754944e-38, %v732
        %v734 = vsel %vm731, %v733, %v729
        %v735 = vmul.f32 %v663, %v734
        %736 = vst.msk [vmem:[%s428] sm:$0xff] %vm635, %v690
        %737 = vst.msk [vmem:[%s428 + $0x8] sm:$0xff] %vm635, %v705
        %738 = vst.msk [vmem:[%s428 + $0x10] sm:$0xff] %vm635, %v720
        %739 = vst.msk [vmem:[%s428 + $0x18] sm:$0xff] %vm635, %v735
        %v741 = vsel %vm635, %v690, 0
        %743 = vmatpush.msra.mxu0 0.0
        %744 = vmatpush.msra.mxu0 0.0
        %745 = vmatpush.msra.mxu0 0.0
        %746 = vmatpush.msra.mxu0 0.0
        %747 = vmatpush.msra.mxu0 0.0
        %748 = vmatpush.msra.mxu0 0.0
        %749 = vmatpush.msra.mxu0 0.0
        %750 = vmatpush.msra.mxu0 0.0
        %751 = vmatpush.msra.mxu0 0.0
        %752 = vmatpush.msra.mxu0 0.0
        %753 = vmatpush.msra.mxu0 0.0
        %754 = vmatpush.msra.mxu0 0.0
        %755 = vmatpush.msra.mxu0 0.0
        %756 = vmatpush.msra.mxu0 0.0
        %757 = vmatpush.msra.mxu0 %v446
        %758 = vmatpush.msra.mxu0 %v445
        %759 = vmatmul.f32.gmra.mxu0 %v741
        %v760 = vpop.f32.mrf.mxu0
        %v761 = vadd.f32 0.0, %v760
        %762 = vdwg.mxu0
        %v764 = vsel %vm635, %v705, 0
        %766 = vmatpush.msra.mxu0 0.0
        %767 = vmatpush.msra.mxu0 0.0
        %768 = vmatpush.msra.mxu0 0.0
        %769 = vmatpush.msra.mxu0 0.0
        %770 = vmatpush.msra.mxu0 0.0
        %771 = vmatpush.msra.mxu0 0.0
        %772 = vmatpush.msra.mxu0 0.0
        %773 = vmatpush.msra.mxu0 0.0
        %774 = vmatpush.msra.mxu0 0.0
        %775 = vmatpush.msra.mxu0 0.0
        %776 = vmatpush.msra.mxu0 0.0
        %777 = vmatpush.msra.mxu0 0.0
        %778 = vmatpush.msra.mxu0 0.0
        %779 = vmatpush.msra.mxu0 0.0
        %780 = vmatpush.msra.mxu0 %v448
        %781 = vmatpush.msra.mxu0 %v447
        %782 = vmatmul.f32.gmra.mxu0 %v764
        %v783 = vpop.f32.mrf.mxu0
        %v784 = vadd.f32 0.0, %v783
        %785 = vdwg.mxu0
        %v787 = vsel %vm635, %v720, 0
        %789 = vmatpush.msra.mxu0 0.0
        %790 = vmatpush.msra.mxu0 0.0
        %791 = vmatpush.msra.mxu0 0.0
        %792 = vmatpush.msra.mxu0 0.0
        %793 = vmatpush.msra.mxu0 0.0
        %794 = vmatpush.msra.mxu0 0.0
        %795 = vmatpush.msra.mxu0 0.0
        %796 = vmatpush.msra.mxu0 0.0
        %797 = vmatpush.msra.mxu0 0.0
        %798 = vmatpush.msra.mxu0 0.0
        %799 = vmatpush.msra.mxu0 0.0
        %800 = vmatpush.msra.mxu0 0.0
        %801 = vmatpush.msra.mxu0 0.0
        %802 = vmatpush.msra.mxu0 0.0
        %803 = vmatpush.msra.mxu0 %v450
        %804 = vmatpush.msra.mxu0 %v449
        %805 = vmatmul.f32.gmra.mxu0 %v787
        %v806 = vpop.f32.mrf.mxu0
        %v807 = vadd.f32 0.0, %v806
        %808 = vdwg.mxu0
        %v810 = vsel %vm635, %v735, 0
        %812 = vmatpush.msra.mxu0 0.0
        %813 = vmatpush.msra.mxu0 0.0
        %814 = vmatpush.msra.mxu0 0.0
        %815 = vmatpush.msra.mxu0 0.0
        %816 = vmatpush.msra.mxu0 0.0
        %817 = vmatpush.msra.mxu0 0.0
        %818 = vmatpush.msra.mxu0 0.0
        %819 = vmatpush.msra.mxu0 0.0
        %820 = vmatpush.msra.mxu0 0.0
        %821 = vmatpush.msra.mxu0 0.0
        %822 = vmatpush.msra.mxu0 0.0
        %823 = vmatpush.msra.mxu0 0.0
        %824 = vmatpush.msra.mxu0 0.0
        %825 = vmatpush.msra.mxu0 0.0
        %826 = vmatpush.msra.mxu0 %v452
        %827 = vmatpush.msra.mxu0 %v451
        %828 = vmatmul.f32.gmra.mxu0 %v810
        %v829 = vpop.f32.mrf.mxu0
        %v830 = vadd.f32 0.0, %v829
        %831 = vdwg.mxu0
        %v832 = vld [vmem:[#allocation8] sm:$0xff]
        %v833 = vld [vmem:[#allocation8 + $0x8] sm:$0xff]
        %v834 = vld [vmem:[#allocation8 + $0x10] sm:$0xff]
        %v835 = vld [vmem:[#allocation8 + $0x18] sm:$0xff]
        %v836 = vld [vmem:[#allocation10] sm:$0xff]
        %v837 = vld [vmem:[#allocation10 + $0x8] sm:$0xff]
        %v838 = vld [vmem:[#allocation10 + $0x10] sm:$0xff]
        %v839 = vld [vmem:[#allocation10 + $0x18] sm:$0xff]
        %840 = vmatpush.msra.mxu0 0.0
        %841 = vmatpush.msra.mxu0 0.0
        %842 = vmatpush.msra.mxu0 0.0
        %843 = vmatpush.msra.mxu0 0.0
        %844 = vmatpush.msra.mxu0 0.0
        %845 = vmatpush.msra.mxu0 0.0
        %846 = vmatpush.msra.mxu0 0.0
        %847 = vmatpush.msra.mxu0 0.0
        %848 = vmatpush.msra.mxu0 0.0
        %849 = vmatpush.msra.mxu0 0.0
        %850 = vmatpush.msra.mxu0 0.0
        %851 = vmatpush.msra.mxu0 0.0
        %852 = vmatpush.msra.mxu0 %v839
        %853 = vmatpush.msra.mxu0 %v838
        %854 = vmatpush.msra.mxu0 %v837
        %855 = vmatpush.msra.mxu0 %v836
        %856 = vmatmul.f32.gmra.mxu0 %v459
        %v857 = vpop.f32.mrf.mxu0
        %v858 = vadd.f32 0.0, %v857
        %859 = vmatmul.f32.gmra.mxu0 %v462
        %v860 = vpop.f32.mrf.mxu0
        %v861 = vadd.f32 0.0, %v860
        %862 = vmatmul.f32.gmra.mxu0 %v465
        %v863 = vpop.f32.mrf.mxu0
        %v864 = vadd.f32 0.0, %v863
        %865 = vmatmul.f32.gmra.mxu0 %v468
        %v866 = vpop.f32.mrf.mxu0
        %v867 = vadd.f32 0.0, %v866
        %868 = vdwg.mxu0
        %v870 = vsel %vm457, %v761, 0
        %v873 = vsel %vm457, %v784, 0
        %v876 = vsel %vm457, %v807, 0
        %v879 = vsel %vm457, %v830, 0
        %881 = vmatpush.msra.mxu0 0.0
        %882 = vmatpush.msra.mxu0 0.0
        %883 = vmatpush.msra.mxu0 0.0
        %884 = vmatpush.msra.mxu0 0.0
        %885 = vmatpush.msra.mxu0 0.0
        %886 = vmatpush.msra.mxu0 0.0
        %887 = vmatpush.msra.mxu0 0.0
        %888 = vmatpush.msra.mxu0 0.0
        %889 = vmatpush.msra.mxu0 0.0
        %890 = vmatpush.msra.mxu0 0.0
        %891 = vmatpush.msra.mxu0 0.0
        %892 = vmatpush.msra.mxu0 0.0
        %893 = vmatpush.msra.mxu0 %v835
        %894 = vmatpush.msra.mxu0 %v834
        %895 = vmatpush.msra.mxu0 %v833
        %896 = vmatpush.msra.mxu0 %v832
        %897 = vmatmul.f32.gmra.mxu0 %v870
        %v898 = vpop.f32.mrf.mxu0
        %v899 = vadd.f32 %v858, %v898
        %900 = vmatmul.f32.gmra.mxu0 %v873
        %v901 = vpop.f32.mrf.mxu0
        %v902 = vadd.f32 %v861, %v901
        %903 = vmatmul.f32.gmra.mxu0 %v876
        %v904 = vpop.f32.mrf.mxu0
        %v905 = vadd.f32 %v864, %v904
        %906 = vmatmul.f32.gmra.mxu0 %v879
        %v907 = vpop.f32.mrf.mxu0
        %v908 = vadd.f32 %v867, %v907
        %909 = vdwg.mxu0
        %v910 = vtanh.pop %v899
        %v911 = vtanh.pop %v902
        %v912 = vtanh.pop %v905
        %v913 = vtanh.pop %v908
        %914 = vst.msk [vmem:[%s421] sm:$0xff] %vm457, %v910
        %915 = vst.msk [vmem:[%s421 + $0x8] sm:$0xff] %vm457, %v911
        %916 = vst.msk [vmem:[%s421 + $0x10] sm:$0xff] %vm457, %v912
        %917 = vst.msk [vmem:[%s421 + $0x18] sm:$0xff] %vm457, %v913
        %s918 = sand.u32 %s177, 1
        %s919 = scalar_lea.sflag [#allocation4], %s918
        %s920 = sand.u32 %s177, 1
        %s921 = smul.addr %s920, 32
        %s922 = scalar_lea.vmem [#allocation11], %s921
        %s923 = sand.u32 %s33, 1
        %s924 = scalar_lea.sflag [#allocation13], %s923
        %s925 = sand.u32 %s203, 1
        %s926 = smul.addr %s925, 32
        %s927 = scalar_lea.vmem [#allocation12], %s926
        %s928 = sand.u32 %s33, 1
        %s929 = scalar_lea.sflag [#allocation13], %s928
        %s930 = sand.u32 %s229, 1
        %s931 = smul.addr %s930, 32
        %s932 = scalar_lea.vmem [#allocation14], %s931
        // Predicated region
        $region65: #{tpu_custom_call.1} parent=43 // pred_check
          %p933 = pneg %p187
        $region66: #{tpu_custom_call.1} parent=43 // pred_check_branch
          %935 = sbr.rel (%p933) target = $region68
        $region67: #{tpu_custom_call.1} parent=43 // pred_region
          %s936 = smul.u32 4, %s33
          %938 = vsyncadd %s919, 0
          %s939 = smul.addr %s936, 8
          %s940 = scalar_lea.hbm %s6, %s939
          %s941 = sshll.u32 %s922, 4
          %s942 = int_to_ptr.vmem [resolvable:$true] %s941
          %s943 = sshll.u32 %s940, 4
          %s944 = int_to_ptr.hbm [resolvable:$true] %s943
          %949 = dma.vmem_to_hbm [thread:$0]  %s942, 512, %s944, %s919, 128, 128, 8
        $region68: #{tpu_custom_call.1} parent=43 // pred_fallthru
          _
        // Predicated region
        $region69: #{tpu_custom_call.1} parent=43 // pred_check
          %p950 = pneg %p213
        $region70: #{tpu_custom_call.1} parent=43 // pred_check_branch
          %952 = sbr.rel (%p950) target = $region72
        $region71: #{tpu_custom_call.1} parent=43 // pred_region
          %s953 = smul.u32 4, %s33
          %955 = vsyncadd %s924, 0
          %s956 = smul.addr %s953, 8
          %s957 = scalar_lea.hbm %s7, %s956
          %s958 = sshll.u32 %s927, 4
          %s959 = int_to_ptr.vmem [resolvable:$true] %s958
          %s960 = sshll.u32 %s957, 4
          %s961 = int_to_ptr.hbm [resolvable:$true] %s960
          %966 = dma.vmem_to_hbm [thread:$0]  %s959, 512, %s961, %s924, 128, 128, 8
        $region72: #{tpu_custom_call.1} parent=43 // pred_fallthru
          _
        // Predicated region
        $region73: #{tpu_custom_call.1} parent=43 // pred_check
          %p967 = pneg %p239
        $region74: #{tpu_custom_call.1} parent=43 // pred_check_branch
          %969 = sbr.rel (%p967) target = $region76
        $region75: #{tpu_custom_call.1} parent=43 // pred_region
          %s970 = smul.u32 4, %s33
          %972 = vsyncadd %s929, 0
          %s973 = smul.addr %s970, 8
          %s974 = scalar_lea.hbm %s8, %s973
          %s975 = sshll.u32 %s932, 4
          %s976 = int_to_ptr.vmem [resolvable:$true] %s975
          %s977 = sshll.u32 %s974, 4
          %s978 = int_to_ptr.hbm [resolvable:$true] %s977
          %983 = dma.vmem_to_hbm [thread:$0]  %s976, 512, %s978, %s929, 128, 128, 8
        $region76: #{tpu_custom_call.1} parent=43 // pred_fallthru
          _
      $region44: #{tpu_custom_call.1} parent=5 // pred_fallthru
        _
      %p984 = scmp.le.s32.totalorder 2, %s28
      // Predicated region
      $region77: #{tpu_custom_call.1} parent=5 // pred_check
        %p985 = pneg %p984
      $region78: #{tpu_custom_call.1} parent=5 // pred_check_branch
        %987 = sbr.rel (%p985) target = $region80
      $region79: #{tpu_custom_call.1} parent=5 // pred_region
        %s988 = ssub.s32 %s28, 2
        // Predicated region
        $region81: #{tpu_custom_call.1} parent=79 // pred_check
          %p989 = pneg %p193
        $region82: #{tpu_custom_call.1} parent=79 // pred_check_branch
          %991 = sbr.rel (%p989) target = $region84
        $region83: #{tpu_custom_call.1} parent=79 // pred_region
          %s992 = sand.u32 %s178, 1
          %s993 = scalar_lea.sflag [#allocation4], %s992
          %s994 = sand.u32 %s178, 1
          %s995 = smul.addr %s994, 32
          %s996 = scalar_lea.vmem [#allocation11], %s995
          %998 = dma.done %s993, 512
        $region84: #{tpu_custom_call.1} parent=79 // pred_fallthru
          _
        // Predicated region
        $region85: #{tpu_custom_call.1} parent=79 // pred_check
          %p999 = pneg %p219
        $region86: #{tpu_custom_call.1} parent=79 // pred_check_branch
          %1001 = sbr.rel (%p999) target = $region88
        $region87: #{tpu_custom_call.1} parent=79 // pred_region
          %s1002 = sand.u32 %s34, 1
          %s1003 = scalar_lea.sflag [#allocation13], %s1002
          %s1004 = sand.u32 %s204, 1
          %s1005 = smul.addr %s1004, 32
          %s1006 = scalar_lea.vmem [#allocation12], %s1005
          %1008 = dma.done %s1003, 512
        $region88: #{tpu_custom_call.1} parent=79 // pred_fallthru
          _
        // Predicated region
        $region89: #{tpu_custom_call.1} parent=79 // pred_check
          %p1009 = pneg %p245
        $region90: #{tpu_custom_call.1} parent=79 // pred_check_branch
          %1011 = sbr.rel (%p1009) target = $region92
        $region91: #{tpu_custom_call.1} parent=79 // pred_region
          %s1012 = sand.u32 %s34, 1
          %s1013 = scalar_lea.sflag [#allocation13], %s1012
          %s1014 = sand.u32 %s230, 1
          %s1015 = smul.addr %s1014, 32
          %s1016 = scalar_lea.vmem [#allocation14], %s1015
          %1018 = dma.done %s1013, 512
        $region92: #{tpu_custom_call.1} parent=79 // pred_fallthru
          _
      $region80: #{tpu_custom_call.1} parent=5 // pred_fallthru
        _
    $region6: #{tpu_custom_call.1} parent=1 // loop_footer
      %s32 = sadd.s32 1, %s28
    $region7: #{tpu_custom_call.1} parent=1 // loop_footer_branch
      %27 = sbr.rel target = $region3
    $region8: #{tpu_custom_call.1} parent=1 // loop_exit
      _
    %1019 = vsyncpa [#allocation3], 1
    %s1020 = scalar_lea.sflag [#allocation3], 1
    %1021 = vsyncpa %s1020, 1
    %1022 = vsyncpa [#allocation6], 1
    %s1023 = scalar_lea.sflag [#allocation6], 1
    %1024 = vsyncpa %s1023, 1
    %1025 = vsyncpa [#allocation9], 1
    %1026 = vsyncpa [#allocation4], 1
    %s1027 = scalar_lea.sflag [#allocation4], 1
    %1028 = vsyncpa %s1027, 1
    %1029 = vsyncpa [#allocation13], 1
    %s1030 = scalar_lea.sflag [#allocation13], 1
    %1031 = vsyncpa %s1030, 1

</llo_original>
